<compile_context>
chip_gen: v7x
topology: tpu7x:2x2x1
jax: 0.10.0
libtpu: 0.0.40
codegen_flags: <defaults>
</compile_context>

<pallas_src>
import jax
import jax.numpy as jnp
import jax.scipy.linalg as jsl
from jax.experimental import pallas as pl
from jax.experimental.pallas import tpu as pltpu

# ---------------- architecture (small, consistent with COR_G) ----------------
N_ITEMS  = 16                              # dim of D and of final scores
E1_SIZE  = 8
MLP_Q    = [N_ITEMS + E1_SIZE, 16, 8]      # encoder; MLP_Q[-1] == E2 dim
MLP_P1_1 = [1, 8, 4]                       # per-scalar MLP (input dim must be 1)
MLP_P1_2 = [4, 8, 1]                       # per-Z1-node matrices; last dim must be 1
MLP_P2   = [MLP_Q[-1], 8, 8]
Z1_SIZE  = 6                               # adj.size(0)
MLP_P3   = [Z1_SIZE + MLP_P2[-1], 16, N_ITEMS]
E2_SIZE  = MLP_Q[-1]
BATCH    = 8

P1_F     = E1_SIZE + E2_SIZE               # 16 features feed the per-scalar MLP
H0_W     = P1_F * MLP_P1_1[1]              # 16*8 = 128 (exactly one f32 vreg of lanes)
G0_W     = Z1_SIZE * MLP_P1_2[1]           # 6*8  = 48
OUT_W    = N_ITEMS + 2 * E2_SIZE           # 16 + 8 + 8 = 32 packed output lanes
SLAB_LANES = 128

# ------------------ packed weight-slab layout (all static) -------------------
_SLAB_ENTRIES = [
    ("wq0_d",    N_ITEMS,      MLP_Q[1]),
    ("wq0_e1",   E1_SIZE,      MLP_Q[1]),
    ("bq0",      1,            MLP_Q[1]),
    ("wq1",      MLP_Q[1],     2 * E2_SIZE),
    ("bq1",      1,            2 * E2_SIZE),
    ("w0big_e1", E1_SIZE,      H0_W),
    ("w0big_e2", E2_SIZE,      H0_W),
    ("b0big",    1,            H0_W),
    ("p_fused",  H0_W,         G0_W),
    ("b_g0",     1,            G0_W),
    ("m1big",    G0_W,         Z1_SIZE),
    ("w20",      MLP_P2[0],    MLP_P2[1]),
    ("b20",      1,            MLP_P2[1]),
    ("w21_mu",   MLP_P2[1],    MLP_P2[2]),
    ("b21_mu",   1,            MLP_P2[2]),
    ("w30_z1",   Z1_SIZE,      MLP_P3[1]),
    ("w30_z2",   MLP_P2[2],    MLP_P3[1]),
    ("b30",      1,            MLP_P3[1]),
    ("w31",      MLP_P3[1],    MLP_P3[2]),
    ("b31",      1,            MLP_P3[2]),
]


def _build_layout():
    layout, r = {}, 0
    for name, rows, cols in _SLAB_ENTRIES:
        assert cols <= SLAB_LANES
        layout[name] = (r, rows, cols)
        r += ((rows + 7) // 8) * 8          # keep every block 8-sublane aligned
    return layout, r


LAYOUT, SLAB_ROWS = _build_layout()


# --------------------------------- kernel ------------------------------------
def cor_g_kernel(d_ref, e1_ref, w_ref, out_ref):
    f32 = jnp.float32

    def w(name):                             # static zero-cost carve-out of the slab
        r0, rows, cols = LAYOUT[name]
        return w_ref[r0:r0 + rows, :cols]

    D = d_ref[...]                           # [bt, 16]
    E1 = e1_ref[...]                         # [bt, 8]

    # ---- encoder q (concat(D,E1) realised as split matmul) ----
    h = jnp.tanh(jnp.dot(D, w("wq0_d"), preferred_element_type=f32)
                 + jnp.dot(E1, w("wq0_e1"), preferred_element_type=f32)
                 + w("bq0"))
    h_enc = jnp.dot(h, w("wq1"), preferred_element_type=f32) + w("bq1")   # [bt,16] = mu|logvar
    E2 = h_enc[:, :E2_SIZE]                  # eval-mode reparameterize == mu

    # ---- p1 chain: per-scalar layer0 (lane-packed) then fused (p1_1 L1 ∘ adj ∘ p1_2 L0) ----
    h0 = jnp.tanh(jnp.dot(E1, w("w0big_e1"), preferred_element_type=f32)
                  + jnp.dot(E2, w("w0big_e2"), preferred_element_type=f32)
                  + w("b0big"))                                           # [bt,128], ONE tanh
    g0 = jnp.tanh(jnp.dot(h0, w("p_fused"), preferred_element_type=f32)
                  + w("b_g0"))                                            # [bt,48],  ONE tanh
    Z1 = jnp.dot(g0, w("m1big"), preferred_element_type=f32)              # [bt,6]  (mu column only)

    # ---- p2 on E2 (mu half only) ----
    h2 = jnp.tanh(jnp.dot(E2, w("w20"), preferred_element_type=f32) + w("b20"))
    Z2 = jnp.dot(h2, w("w21_mu"), preferred_element_type=f32) + w("b21_mu")   # [bt,8]

    # ---- p3 on cat(Z1, Z2) (split matmul) ----
    h3 = jnp.tanh(jnp.dot(Z1, w("w30_z1"), preferred_element_type=f32)
                  + jnp.dot(Z2, w("w30_z2"), preferred_element_type=f32)
                  + w("b30"))
    scores = jnp.dot(h3, w("w31"), preferred_element_type=f32) + w("b31")     # [bt,16]

    # ---- single packed output block: scores | mu | logvar ----
    out_ref[:, :N_ITEMS] = scores
    out_ref[:, N_ITEMS:] = h_enc


# ------------------------- host-side parameter prep --------------------------
def init_params(key):
    def lin(k, d_in, d_out):
        k1, k2 = jax.random.split(k)
        std = (2.0 / (d_in + d_out)) ** 0.5
        W = std * jax.random.normal(k1, (d_in, d_out), jnp.float32)   # stored as (in, out)
        b = 0.001 * jax.random.normal(k2, (1, d_out), jnp.float32)
        return W, b

    ks = jax.random.split(key, 12)
    p = {}
    p["wq0"], p["bq0"] = lin(ks[0], MLP_Q[0], MLP_Q[1])
    p["wq1"], p["bq1"] = lin(ks[1], MLP_Q[1], 2 * MLP_Q[2])
    p["w110"], p["b110"] = lin(ks[2], MLP_P1_1[0], MLP_P1_1[1])
    p["w111"], p["b111"] = lin(ks[3], MLP_P1_1[1], MLP_P1_1[2])
    std0 = (2.0 / (Z1_SIZE + MLP_P1_2[0])) ** 0.5
    std1 = (2.0 / (Z1_SIZE + MLP_P1_2[1])) ** 0.5
    p["M0"] = std0 * jax.random.normal(ks[4], (Z1_SIZE, MLP_P1_2[0], MLP_P1_2[1]), jnp.float32)
    p["M1"] = std1 * jax.random.normal(ks[5], (Z1_SIZE, MLP_P1_2[1], 2 * MLP_P1_2[2]), jnp.float32)
    p["w20"], p["b20"] = lin(ks[6], MLP_P2[0], MLP_P2[1])
    p["w21"], p["b21"] = lin(ks[7], MLP_P2[1], 2 * MLP_P2[2])
    p["w30"], p["b30"] = lin(ks[8], MLP_P3[0], MLP_P3[1])
    p["w31"], p["b31"] = lin(ks[9], MLP_P3[1], MLP_P3[2])
    p["adj"] = jax.random.bernoulli(ks[10], 0.5,
                                    (Z1_SIZE, E1_SIZE + E2_SIZE)).astype(jnp.float32)
    return p


def pack_cor_g_params(p):
    """One-time host precompute: compose block-structured matrices and pack the slab."""
    f32 = jnp.float32
    d1 = MLP_P1_1[2]                                        # 4
    eyeF = jnp.eye(P1_F, dtype=f32)

    # p1_1 layer 0, lane-packed: h0[b, f*8+k] = tanh(X[b,f]*w110[k] + b110[k])
    w0big = jnp.kron(eyeF, p["w110"])                       # [16, 128]
    b0big = jnp.tile(p["b110"], (1, P1_F))                  # [1, 128]

    # p1_1 layer 1 (no act) ∘ adjacency ∘ p1_2 layer 0 — all linear => one matrix.
    w1big = jnp.kron(eyeF, p["w111"])                       # [128, 64]  block-diag w111
    abig = jnp.kron(p["adj"].T, jnp.eye(d1, dtype=f32))     # [64, 24]   adjacency per channel
    m0big = jsl.block_diag(*[p["M0"][z] for z in range(Z1_SIZE)])          # [24, 48]
    p_fused = w1big @ abig @ m0big                          # [128, 48]
    rowsum = jnp.sum(p["adj"], axis=1).reshape(1, Z1_SIZE)  # [1, 6]
    b_g0 = jnp.kron(rowsum, p["b111"]) @ m0big              # [1, 48] (bias through adj & M0)

    # p1_2 last layer: keep only the mu column (logvar half unused in eval mode).
    m1big = jsl.block_diag(*[p["M1"][z, :, 0:1] for z in range(Z1_SIZE)])  # [48, 6]

    tensors = {
        "wq0_d": p["wq0"][:N_ITEMS], "wq0_e1": p["wq0"][N_ITEMS:],
        "bq0": p["bq0"], "wq1": p["wq1"], "bq1": p["bq1"],
        "w0big_e1": w0big[:E1_SIZE], "w0big_e2": w0big[E1_SIZE:], "b0big": b0big,
        "p_fused": p_fused, "b_g0": b_g0, "m1big": m1big,
        "w20": p["w20"], "b20": p["b20"],
        "w21_mu": p["w21"][:, :MLP_P2[-1]], "b21_mu": p["b21"][:, :MLP_P2[-1]],
        "w30_z1": p["w30"][:Z1_SIZE], "w30_z2": p["w30"][Z1_SIZE:], "b30": p["b30"],
        "w31": p["w31"], "b31": p["b31"],
    }
    slab = jnp.zeros((SLAB_ROWS, SLAB_LANES), jnp.float32)
    for name, (r0, rows, cols) in LAYOUT.items():
        slab = slab.at[r0:r0 + rows, :cols].set(tensors[name])

    # L2 regularization term over Linear weights only (as in the PyTorch module).
    w_sq_sum = sum(jnp.sum(p[k] ** 2)
                   for k in ("wq0", "wq1", "w110", "w111", "w20", "w21", "w30", "w31"))
    return slab, w_sq_sum


# ------------------------------ forward wrapper -------------------------------
def cor_g_forward(D, E1, packed, regs=0.0, batch_tile=None):
    slab, w_sq_sum = packed
    B = D.shape[0]
    bt = batch_tile if batch_tile is not None else min(B, 256)
    if B % bt != 0 or (bt % 8 != 0 and bt != B):
        bt = B                                # fall back to one block covering the batch
    grid = (B // bt,)

    out = pl.pallas_call(
        cor_g_kernel,
        out_shape=jax.ShapeDtypeStruct((B, OUT_W), jnp.float32),
        grid=grid,
        in_specs=[
            pl.BlockSpec((bt, N_ITEMS), lambda i: (i, 0)),
            pl.BlockSpec((bt, E1_SIZE), lambda i: (i, 0)),
            pl.BlockSpec((SLAB_ROWS, SLAB_LANES), lambda i: (0, 0)),
        ],
        out_specs=pl.BlockSpec((bt, OUT_W), lambda i: (i, 0)),
        compiler_params=pltpu.CompilerParams(dimension_semantics=("parallel",)),
    )(D, E1, slab)

    scores = out[:, :N_ITEMS]
    mu = out[:, N_ITEMS:N_ITEMS + E2_SIZE]
    logvar = out[:, N_ITEMS + E2_SIZE:]
    reg_loss = regs * 0.5 * w_sq_sum
    return scores, mu, logvar, reg_loss


# ------------------------ pure-JAX reference (eval mode) ----------------------
def cor_g_reference(D, E1, p):
    h = jnp.tanh(jnp.concatenate([D, E1], axis=1) @ p["wq0"] + p["bq0"])
    h = h @ p["wq1"] + p["bq1"]
    mu, logvar = h[:, :E2_SIZE], h[:, E2_SIZE:]
    E2 = mu
    X = jnp.concatenate([E1, E2], axis=1)[:, :, None]                 # [B,16,1]
    h0 = jnp.tanh(X @ p["w110"] + p["b110"])                          # [B,16,8]
    h1 = h0 @ p["w111"] + p["b111"]                                   # [B,16,4]
    hp1 = jnp.einsum("zf,bfj->bzj", p["adj"], h1)                     # [B,6,4]
    g0 = jnp.tanh(jnp.einsum("bzj,zjo->bzo", hp1, p["M0"]))           # [B,6,8]
    g1 = jnp.einsum("bzi,zio->bzo", g0, p["M1"])                      # [B,6,2]
    Z1 = g1[:, :, 0]
    h2 = jnp.tanh(E2 @ p["w20"] + p["b20"])
    h2 = h2 @ p["w21"] + p["b21"]
    Z2 = h2[:, :MLP_P2[-1]]
    up = jnp.concatenate([Z1, Z2], axis=1)
    h3 = jnp.tanh(up @ p["w30"] + p["b30"])
    scores = h3 @ p["w31"] + p["b31"]
    return scores, mu, logvar


if __name__ == "__main__":
    key = jax.random.PRNGKey(0)
    kp, kd, ke = jax.random.split(key, 3)
    params = init_params(kp)
    D = (jax.random.uniform(kd, (BATCH, N_ITEMS)) > 0.5).astype(jnp.float32)
    E1 = jax.random.normal(ke, (BATCH, E1_SIZE), jnp.float32)

    packed = pack_cor_g_params(params)
    scores, mu, logvar, reg_loss = cor_g_forward(D, E1, packed, regs=0.0)
    jax.block_until_ready((scores, mu, logvar, reg_loss))

    assert scores.shape == (BATCH, N_ITEMS)
    assert mu.shape == (BATCH, E2_SIZE) and logvar.shape == (BATCH, E2_SIZE)

    # verify the fused/composed kernel against the straightforward reference
    r_scores, r_mu, r_logvar = cor_g_reference(D, E1, params)
    assert jnp.allclose(scores, r_scores, atol=1e-3, rtol=1e-3)
    assert jnp.allclose(mu, r_mu, atol=1e-3, rtol=1e-3)
    assert jnp.allclose(logvar, r_logvar, atol=1e-3, rtol=1e-3)
    print("KERNEL_OK")
</pallas_src>

<mosaic_0001>
module attributes {stable_mosaic.version = 11 : i64} {
  func.func @cor_g_kernel(%arg0: i32, %arg1: memref<8x16xf32, #tpu.memory_space<vmem>>, %arg2: memref<8x8xf32, #tpu.memory_space<vmem>>, %arg3: memref<344x128xf32, #tpu.memory_space<vmem>>, %arg4: memref<8x32xf32, #tpu.memory_space<vmem>>) attributes {dimension_semantics = [#tpu.dimension_semantics<parallel>], iteration_bounds = array<i64: 1>, scalar_prefetch = 0 : i64, scratch_operands = 0 : i64, tpu.core_type = #tpu.core_type<tc>, window_params = [{transform_indices = @transform_0, window_bounds = array<i64: 8, 16>}, {transform_indices = @transform_1, window_bounds = array<i64: 8, 8>}, {pipeline_mode = #tpu.pipeline_mode<synchronous>, transform_indices = @transform_2, window_bounds = array<i64: 344, 128>}, {transform_indices = @transform_3, window_bounds = array<i64: 8, 32>}]} {
    %c0 = arith.constant 0 : index
    %c0_0 = arith.constant 0 : index
    %0 = vector.load %arg1[%c0, %c0_0] : memref<8x16xf32, #tpu.memory_space<vmem>>, vector<8x16xf32>
    %c0_1 = arith.constant 0 : index
    %c0_2 = arith.constant 0 : index
    %1 = vector.load %arg2[%c0_1, %c0_2] : memref<8x8xf32, #tpu.memory_space<vmem>>, vector<8x8xf32>
    %c0_3 = arith.constant 0 : index
    %c0_4 = arith.constant 0 : index
    %2 = vector.load %arg3[%c0_3, %c0_4] : memref<344x128xf32, #tpu.memory_space<vmem>>, vector<16x16xf32>
    %cst = arith.constant dense<0.000000e+00> : vector<8x16xf32>
    %3 = tpu.matmul %0, %2, %cst {dimension_numbers = #tpu.dot_dimension_numbers<[1], [0], [0], [1], [0, 0, 1, 1], [], []>} : vector<8x16xf32>, vector<16x16xf32>, vector<8x16xf32> -> vector<8x16xf32>
    %c16 = arith.constant 16 : index
    %c0_5 = arith.constant 0 : index
    %4 = vector.load %arg3[%c16, %c0_5] : memref<344x128xf32, #tpu.memory_space<vmem>>, vector<8x16xf32>
    %cst_6 = arith.constant dense<0.000000e+00> : vector<8x16xf32>
    %5 = tpu.matmul %1, %4, %cst_6 {dimension_numbers = #tpu.dot_dimension_numbers<[1], [0], [0], [1], [0, 0, 1, 1], [], []>} : vector<8x8xf32>, vector<8x16xf32>, vector<8x16xf32> -> vector<8x16xf32>
    %6 = arith.addf %3, %5 : vector<8x16xf32>
    %c24 = arith.constant 24 : index
    %c0_7 = arith.constant 0 : index
    %7 = vector.load %arg3[%c24, %c0_7] : memref<344x128xf32, #tpu.memory_space<vmem>>, vector<1x16xf32>
    %8 = vector.broadcast %7 : vector<1x16xf32> to vector<8x16xf32>
    %9 = arith.addf %6, %8 : vector<8x16xf32>
    %10 = math.tanh %9 : vector<8x16xf32>
    %c32 = arith.constant 32 : index
    %c0_8 = arith.constant 0 : index
    %11 = vector.load %arg3[%c32, %c0_8] : memref<344x128xf32, #tpu.memory_space<vmem>>, vector<16x16xf32>
    %cst_9 = arith.constant dense<0.000000e+00> : vector<8x16xf32>
    %12 = tpu.matmul %10, %11, %cst_9 {dimension_numbers = #tpu.dot_dimension_numbers<[1], [0], [0], [1], [0, 0, 1, 1], [], []>} : vector<8x16xf32>, vector<16x16xf32>, vector<8x16xf32> -> vector<8x16xf32>
    %c48 = arith.constant 48 : index
    %c0_10 = arith.constant 0 : index
    %13 = vector.load %arg3[%c48, %c0_10] : memref<344x128xf32, #tpu.memory_space<vmem>>, vector<1x16xf32>
    %14 = vector.broadcast %13 : vector<1x16xf32> to vector<8x16xf32>
    %15 = arith.addf %12, %14 : vector<8x16xf32>
    %16 = vector.extract_strided_slice %15 {offsets = [0, 0], sizes = [8, 8], strides = [1, 1]} : vector<8x16xf32> to vector<8x8xf32>
    %c56 = arith.constant 56 : index
    %c0_11 = arith.constant 0 : index
    %17 = vector.load %arg3[%c56, %c0_11] : memref<344x128xf32, #tpu.memory_space<vmem>>, vector<8x128xf32>
    %cst_12 = arith.constant dense<0.000000e+00> : vector<8x128xf32>
    %18 = tpu.matmul %1, %17, %cst_12 {dimension_numbers = #tpu.dot_dimension_numbers<[1], [0], [0], [1], [0, 0, 1, 1], [], []>} : vector<8x8xf32>, vector<8x128xf32>, vector<8x128xf32> -> vector<8x128xf32>
    %c64 = arith.constant 64 : index
    %c0_13 = arith.constant 0 : index
    %19 = vector.load %arg3[%c64, %c0_13] : memref<344x128xf32, #tpu.memory_space<vmem>>, vector<8x128xf32>
    %cst_14 = arith.constant dense<0.000000e+00> : vector<8x128xf32>
    %20 = tpu.matmul %16, %19, %cst_14 {dimension_numbers = #tpu.dot_dimension_numbers<[1], [0], [0], [1], [0, 0, 1, 1], [], []>} : vector<8x8xf32>, vector<8x128xf32>, vector<8x128xf32> -> vector<8x128xf32>
    %21 = arith.addf %18, %20 : vector<8x128xf32>
    %c72 = arith.constant 72 : index
    %c0_15 = arith.constant 0 : index
    %22 = vector.load %arg3[%c72, %c0_15] : memref<344x128xf32, #tpu.memory_space<vmem>>, vector<1x128xf32>
    %23 = vector.broadcast %22 : vector<1x128xf32> to vector<8x128xf32>
    %24 = arith.addf %21, %23 : vector<8x128xf32>
    %25 = math.tanh %24 : vector<8x128xf32>
    %c80 = arith.constant 80 : index
    %c0_16 = arith.constant 0 : index
    %26 = vector.load %arg3[%c80, %c0_16] : memref<344x128xf32, #tpu.memory_space<vmem>>, vector<128x48xf32>
    %cst_17 = arith.constant dense<0.000000e+00> : vector<8x48xf32>
    %27 = tpu.matmul %25, %26, %cst_17 {dimension_numbers = #tpu.dot_dimension_numbers<[1], [0], [0], [1], [0, 0, 1, 1], [], []>} : vector<8x128xf32>, vector<128x48xf32>, vector<8x48xf32> -> vector<8x48xf32>
    %c208 = arith.constant 208 : index
    %c0_18 = arith.constant 0 : index
    %28 = vector.load %arg3[%c208, %c0_18] : memref<344x128xf32, #tpu.memory_space<vmem>>, vector<1x48xf32>
    %29 = vector.broadcast %28 : vector<1x48xf32> to vector<8x48xf32>
    %30 = arith.addf %27, %29 : vector<8x48xf32>
    %31 = math.tanh %30 : vector<8x48xf32>
    %c216 = arith.constant 216 : index
    %c0_19 = arith.constant 0 : index
    %32 = vector.load %arg3[%c216, %c0_19] : memref<344x128xf32, #tpu.memory_space<vmem>>, vector<48x6xf32>
    %cst_20 = arith.constant dense<0.000000e+00> : vector<8x6xf32>
    %33 = tpu.matmul %31, %32, %cst_20 {dimension_numbers = #tpu.dot_dimension_numbers<[1], [0], [0], [1], [0, 0, 1, 1], [], []>} : vector<8x48xf32>, vector<48x6xf32>, vector<8x6xf32> -> vector<8x6xf32>
    %c264 = arith.constant 264 : index
    %c0_21 = arith.constant 0 : index
    %34 = vector.load %arg3[%c264, %c0_21] : memref<344x128xf32, #tpu.memory_space<vmem>>, vector<8x8xf32>
    %cst_22 = arith.constant dense<0.000000e+00> : vector<8x8xf32>
    %35 = tpu.matmul %16, %34, %cst_22 {dimension_numbers = #tpu.dot_dimension_numbers<[1], [0], [0], [1], [0, 0, 1, 1], [], []>} : vector<8x8xf32>, vector<8x8xf32>, vector<8x8xf32> -> vector<8x8xf32>
    %c272 = arith.constant 272 : index
    %c0_23 = arith.constant 0 : index
    %36 = vector.load %arg3[%c272, %c0_23] : memref<344x128xf32, #tpu.memory_space<vmem>>, vector<1x8xf32>
    %37 = vector.broadcast %36 : vector<1x8xf32> to vector<8x8xf32>
    %38 = arith.addf %35, %37 : vector<8x8xf32>
    %39 = math.tanh %38 : vector<8x8xf32>
    %c280 = arith.constant 280 : index
    %c0_24 = arith.constant 0 : index
    %40 = vector.load %arg3[%c280, %c0_24] : memref<344x128xf32, #tpu.memory_space<vmem>>, vector<8x8xf32>
    %cst_25 = arith.constant dense<0.000000e+00> : vector<8x8xf32>
    %41 = tpu.matmul %39, %40, %cst_25 {dimension_numbers = #tpu.dot_dimension_numbers<[1], [0], [0], [1], [0, 0, 1, 1], [], []>} : vector<8x8xf32>, vector<8x8xf32>, vector<8x8xf32> -> vector<8x8xf32>
    %c288 = arith.constant 288 : index
    %c0_26 = arith.constant 0 : index
    %42 = vector.load %arg3[%c288, %c0_26] : memref<344x128xf32, #tpu.memory_space<vmem>>, vector<1x8xf32>
    %43 = vector.broadcast %42 : vector<1x8xf32> to vector<8x8xf32>
    %44 = arith.addf %41, %43 : vector<8x8xf32>
    %c296 = arith.constant 296 : index
    %c0_27 = arith.constant 0 : index
    %45 = vector.load %arg3[%c296, %c0_27] : memref<344x128xf32, #tpu.memory_space<vmem>>, vector<6x16xf32>
    %cst_28 = arith.constant dense<0.000000e+00> : vector<8x16xf32>
    %46 = tpu.matmul %33, %45, %cst_28 {dimension_numbers = #tpu.dot_dimension_numbers<[1], [0], [0], [1], [0, 0, 1, 1], [], []>} : vector<8x6xf32>, vector<6x16xf32>, vector<8x16xf32> -> vector<8x16xf32>
    %c304 = arith.constant 304 : index
    %c0_29 = arith.constant 0 : index
    %47 = vector.load %arg3[%c304, %c0_29] : memref<344x128xf32, #tpu.memory_space<vmem>>, vector<8x16xf32>
    %cst_30 = arith.constant dense<0.000000e+00> : vector<8x16xf32>
    %48 = tpu.matmul %44, %47, %cst_30 {dimension_numbers = #tpu.dot_dimension_numbers<[1], [0], [0], [1], [0, 0, 1, 1], [], []>} : vector<8x8xf32>, vector<8x16xf32>, vector<8x16xf32> -> vector<8x16xf32>
    %49 = arith.addf %46, %48 : vector<8x16xf32>
    %c312 = arith.constant 312 : index
    %c0_31 = arith.constant 0 : index
    %50 = vector.load %arg3[%c312, %c0_31] : memref<344x128xf32, #tpu.memory_space<vmem>>, vector<1x16xf32>
    %51 = vector.broadcast %50 : vector<1x16xf32> to vector<8x16xf32>
    %52 = arith.addf %49, %51 : vector<8x16xf32>
    %53 = math.tanh %52 : vector<8x16xf32>
    %c320 = arith.constant 320 : index
    %c0_32 = arith.constant 0 : index
    %54 = vector.load %arg3[%c320, %c0_32] : memref<344x128xf32, #tpu.memory_space<vmem>>, vector<16x16xf32>
    %cst_33 = arith.constant dense<0.000000e+00> : vector<8x16xf32>
    %55 = tpu.matmul %53, %54, %cst_33 {dimension_numbers = #tpu.dot_dimension_numbers<[1], [0], [0], [1], [0, 0, 1, 1], [], []>} : vector<8x16xf32>, vector<16x16xf32>, vector<8x16xf32> -> vector<8x16xf32>
    %c336 = arith.constant 336 : index
    %c0_34 = arith.constant 0 : index
    %56 = vector.load %arg3[%c336, %c0_34] : memref<344x128xf32, #tpu.memory_space<vmem>>, vector<1x16xf32>
    %57 = vector.broadcast %56 : vector<1x16xf32> to vector<8x16xf32>
    %58 = arith.addf %55, %57 : vector<8x16xf32>
    %c0_35 = arith.constant 0 : index
    %c0_36 = arith.constant 0 : index
    %59 = vector.load %arg4[%c0_35, %c0_36] : memref<8x32xf32, #tpu.memory_space<vmem>>, vector<8x16xf32>
    tpu.vector_store %arg4[%c0_35, %c0_36], %58 {strides = array<i32>} : memref<8x32xf32, #tpu.memory_space<vmem>>, vector<8x16xf32>,
    %c0_37 = arith.constant 0 : index
    %c16_38 = arith.constant 16 : index
    %60 = vector.load %arg4[%c0_37, %c16_38] : memref<8x32xf32, #tpu.memory_space<vmem>>, vector<8x16xf32>
    tpu.vector_store %arg4[%c0_37, %c16_38], %15 {strides = array<i32>} : memref<8x32xf32, #tpu.memory_space<vmem>>, vector<8x16xf32>,
    return
  }
  func.func @transform_0(%arg0: i32) -> (i32, i32) {
    %c0_i32 = arith.constant 0 : i32
    %c0_i32_0 = arith.constant 0 : i32
    return %arg0, %c0_i32 : i32, i32
  }
  func.func @transform_1(%arg0: i32) -> (i32, i32) {
    %c0_i32 = arith.constant 0 : i32
    %c0_i32_0 = arith.constant 0 : i32
    return %arg0, %c0_i32 : i32, i32
  }
  func.func @transform_2(%arg0: i32) -> (i32, i32) {
    %c0_i32 = arith.constant 0 : i32
    %c0_i32_0 = arith.constant 0 : i32
    %c0_i32_1 = arith.constant 0 : i32
    return %c0_i32, %c0_i32_0 : i32, i32
  }
  func.func @transform_3(%arg0: i32) -> (i32, i32) {
    %c0_i32 = arith.constant 0 : i32
    %c0_i32_0 = arith.constant 0 : i32
    return %arg0, %c0_i32 : i32, i32
  }
}

</mosaic_0001>

<llo_original>
// kernel: tpu_custom_call.1
$region0: #{tpu_custom_call.1}
  #allocation0 [shape = 'u32[]', space=smem, size = 0x4, offset = 0x4, fixed_abs, tag = 'smem constant byte address 0x4 - core index']
  #allocation1 [shape = 'u32[144,128]{1,0:T(1,128)}', space=vmem, size = 0x12000, scoped, tag = 'internal scratch']
  %s0 = inlined_call_operand.hbm [shape: f32[8,16], index: 0, kind: input, shape index: {}]
  %s1 = inlined_call_operand.hbm [shape: f32[8,8], index: 1, kind: input, shape index: {}]
  %s2 = inlined_call_operand.hbm [shape: f32[344,128], index: 2, kind: input, shape index: {}]
  %s3 = inlined_call_operand.hbm [shape: f32[8,32], index: 3, kind: output, shape index: {}]
  %s4 = sld [smem:[#allocation0]]
  $region34: #{tpu_custom_call.1} parent=0
    _
  %s6 = ssub.s32 1, %s4
  %s7 = scalar_select 0, %s6, %s4
  $region1: #{tpu_custom_call.1} parent=0
    #allocation2 [shape = 'u8[4096]{0}', space=vmem, size = 0x1000, scoped, tag = 'input window, operand 0, single buffered']
    #allocation3 [shape = 's32[1]{0}', space=sflag, size = 0x4, scoped, tag = 'scoped memory for tpu_custom_call.1']
    #allocation4 [shape = 's32[1]{0}', space=sflag, size = 0x4, scoped, tag = 'scoped memory for tpu_custom_call.1']
    #allocation5 [shape = 'u8[4096]{0}', space=vmem, size = 0x1000, scoped, tag = 'input window, operand 1, single buffered']
    #allocation6 [shape = 's32[1]{0}', space=sflag, size = 0x4, scoped, tag = 'scoped memory for tpu_custom_call.1']
    #allocation7 [shape = 'u8[176128]{0}', space=vmem, size = 0x2b000, scoped, tag = 'input window, operand 2, single buffered']
    #allocation8 [shape = 'u8[4096]{0}', space=vmem, size = 0x1000, scoped, tag = 'output window, operand 0, single buffered']
    %8 = vsyncpa [#allocation3], 0
    %9 = vsyncpa [#allocation6], 0
    %10 = vsyncpa [#allocation4], 0
    // Predicated region
    $region2: #{tpu_custom_call.1} parent=1 // pred_check
      _
    $region3: #{tpu_custom_call.1} parent=1 // pred_check_branch
      %12 = sbr.rel (0) target = $region5
    $region4: #{tpu_custom_call.1} parent=1 // pred_region
      %s14 = ssub.s32 128, 128
      %15 = vsyncadd [#allocation3], %s14
      %s17 = sshll.u32 [#allocation2], 4
      %s18 = int_to_ptr.vmem [resolvable:$true] %s17
      %20 = dma.hbm_to_vmem [thread:$0]  %s0, 128, %s18, [#allocation3]
    $region5: #{tpu_custom_call.1} parent=1 // pred_fallthru
      _
    // Predicated region
    $region6: #{tpu_custom_call.1} parent=1 // pred_check
      _
    $region7: #{tpu_custom_call.1} parent=1 // pred_check_branch
      %22 = sbr.rel (0) target = $region9
    $region8: #{tpu_custom_call.1} parent=1 // pred_region
      %s24 = ssub.s32 128, 128
      %25 = vsyncadd [#allocation6], %s24
      %s27 = sshll.u32 [#allocation5], 4
      %s28 = int_to_ptr.vmem [resolvable:$true] %s27
      %30 = dma.hbm_to_vmem [thread:$0]  %s1, 128, %s28, [#allocation6]
    $region9: #{tpu_custom_call.1} parent=1 // pred_fallthru
      _
    // Predicated region
    $region10: #{tpu_custom_call.1} parent=1 // pred_check
      _
    $region11: #{tpu_custom_call.1} parent=1 // pred_check_branch
      %32 = sbr.rel (0) target = $region13
    $region12: #{tpu_custom_call.1} parent=1 // pred_region
      %s34 = ssub.s32 5504, 5504
      %35 = vsyncadd [#allocation6], %s34
      %s36 = sshll.u32 [#allocation7], 4
      %s37 = int_to_ptr.vmem [resolvable:$true] %s36
      %42 = dma.hbm_to_vmem [thread:$0]  %s2, 5504, %s37, [#allocation6], 128, 128, 8
    $region13: #{tpu_custom_call.1} parent=1 // pred_fallthru
      _
    // Predicated region
    $region14: #{tpu_custom_call.1} parent=1 // pred_check
      _
    $region15: #{tpu_custom_call.1} parent=1 // pred_check_branch
      %44 = sbr.rel (0) target = $region17
    $region16: #{tpu_custom_call.1} parent=1 // pred_region
      %45 = dma.done [#allocation3], 128
    $region17: #{tpu_custom_call.1} parent=1 // pred_fallthru
      _
    // Predicated region
    $region18: #{tpu_custom_call.1} parent=1 // pred_check
      _
    $region19: #{tpu_custom_call.1} parent=1 // pred_check_branch
      %47 = sbr.rel (0) target = $region21
    $region20: #{tpu_custom_call.1} parent=1 // pred_region
      %48 = dma.done [#allocation6], 128
    $region21: #{tpu_custom_call.1} parent=1 // pred_fallthru
      _
    // Predicated region
    $region22: #{tpu_custom_call.1} parent=1 // pred_check
      _
    $region23: #{tpu_custom_call.1} parent=1 // pred_check_branch
      %50 = sbr.rel (0) target = $region25
    $region24: #{tpu_custom_call.1} parent=1 // pred_region
      %51 = dma.done [#allocation6], 5504
    $region25: #{tpu_custom_call.1} parent=1 // pred_fallthru
      _
    %v52 = vld [vmem:[#allocation2] sm:$0xff]
    %v53 = vld [vmem:[#allocation5] sm:$0xff]
    %v54 = vld [vmem:[#allocation7] sm:$0xff]
    %v55 = vld [vmem:[#allocation7 + $0x8] sm:$0xff]
    %v56 = vld [vmem:[#allocation7 + $0x10] sm:$0xff]
    %vm57 = vcmask 64512
    %v59 = vsel %vm57, %v53, 0
    %61 = vmatprep.subr.mxu0 0.0
    %62 = vmatpush1.msra.mxu0 %v56
    %63 = vmatprep.subr.mxu0 0.0
    %64 = vmatpush1.msra.mxu0 0.0
    %65 = vmatprep.subr.mxu0 0.0
    %66 = vmatpush1.msra.mxu0 0.0
    %67 = vmatprep.subr.mxu0 0.0
    %68 = vmatpush1.msra.mxu0 0.0
    %69 = vmatprep.subr.mxu0 0.0
    %70 = vmatpush1.msra.mxu0 0.0
    %71 = vmatprep.subr.mxu0 0.0
    %72 = vmatpush1.msra.mxu0 0.0
    %73 = vmatprep.subr.mxu0 0.0
    %74 = vmatpush1.msra.mxu0 0.0
    %75 = vmatprep.subr.mxu0 0.0
    %76 = vmatpush1.msra.mxu0 0.0
    %77 = vmatprep.subr.mxu0 0.0
    %78 = vmatpush1.msra.mxu0 0.0
    %79 = vmatprep.subr.mxu0 0.0
    %80 = vmatpush1.msra.mxu0 0.0
    %81 = vmatprep.subr.mxu0 0.0
    %82 = vmatpush1.msra.mxu0 0.0
    %83 = vmatprep.subr.mxu0 0.0
    %84 = vmatpush1.msra.mxu0 0.0
    %85 = vmatprep.subr.mxu0 0.0
    %86 = vmatpush1.msra.mxu0 0.0
    %87 = vmatprep.subr.mxu0 0.0
    %88 = vmatpush1.msra.mxu0 0.0
    %89 = vmatprep.subr.mxu0 0.0
    %90 = vmatpush1.msra.mxu0 0.0
    %91 = vmatprep.subr.mxu0 0.0
    %92 = vmatpush1.msra.mxu0 0.0
    %93 = vmatprep.subr.mxu0 0.0
    %94 = vmatpush1.msra.mxu0 0.0
    %95 = vmatprep.subr.mxu0 0.0
    %96 = vmatpush1.msra.mxu0 0.0
    %97 = vmatprep.subr.mxu0 0.0
    %98 = vmatpush1.msra.mxu0 0.0
    %99 = vmatprep.subr.mxu0 0.0
    %100 = vmatpush1.msra.mxu0 0.0
    %101 = vmatprep.subr.mxu0 0.0
    %102 = vmatpush1.msra.mxu0 0.0
    %103 = vmatprep.subr.mxu0 0.0
    %104 = vmatpush1.msra.mxu0 0.0
    %105 = vmatprep.subr.mxu0 0.0
    %106 = vmatpush1.msra.mxu0 0.0
    %107 = vmatprep.subr.mxu0 0.0
    %108 = vmatpush1.msra.mxu0 0.0
    %109 = vmatprep.subr.mxu0 0.0
    %110 = vmatpush1.msra.mxu0 0.0
    %111 = vmatprep.subr.mxu0 0.0
    %112 = vmatpush1.msra.mxu0 0.0
    %113 = vmatprep.subr.mxu0 0.0
    %114 = vmatpush1.msra.mxu0 0.0
    %115 = vmatprep.subr.mxu0 0.0
    %116 = vmatpush1.msra.mxu0 0.0
    %117 = vmatprep.subr.mxu0 0.0
    %118 = vmatpush1.msra.mxu0 0.0
    %119 = vmatprep.subr.mxu0 0.0
    %120 = vmatpush1.msra.mxu0 0.0
    %121 = vmatprep.subr.mxu0 0.0
    %122 = vmatpush1.msra.mxu0 0.0
    %123 = vmatprep.subr.mxu0 0.0
    %124 = vmatpush1.msra.mxu0 0.0
    %125 = vmatprep.mubr.f32.mxu0 0.0
    %126 = vmatmul.mubr.f32.gmra.mrb[0].mxu0 %v59
    %v127 = vpop.f32.mrb[0].mxu0
    %v128 = vadd.f32 0.0, %v127
    %v129 = vpop.f32.mrb[0].mxu0
    %130 = vdwg.mxu0
    %vm131 = vcmask 130048
    %v133 = vsel %vm131, %v52, 0
    %135 = vmatprep.subr.mxu0 0.0
    %136 = vmatpush1.msra.mxu0 %v54
    %137 = vmatprep.subr.mxu0 0.0
    %138 = vmatpush1.msra.mxu0 %v55
    %139 = vmatprep.subr.mxu0 0.0
    %140 = vmatpush1.msra.mxu0 0.0
    %141 = vmatprep.subr.mxu0 0.0
    %142 = vmatpush1.msra.mxu0 0.0
    %143 = vmatprep.subr.mxu0 0.0
    %144 = vmatpush1.msra.mxu0 0.0
    %145 = vmatprep.subr.mxu0 0.0
    %146 = vmatpush1.msra.mxu0 0.0
    %147 = vmatprep.subr.mxu0 0.0
    %148 = vmatpush1.msra.mxu0 0.0
    %149 = vmatprep.subr.mxu0 0.0
    %150 = vmatpush1.msra.mxu0 0.0
    %151 = vmatprep.subr.mxu0 0.0
    %152 = vmatpush1.msra.mxu0 0.0
    %153 = vmatprep.subr.mxu0 0.0
    %154 = vmatpush1.msra.mxu0 0.0
    %155 = vmatprep.subr.mxu0 0.0
    %156 = vmatpush1.msra.mxu0 0.0
    %157 = vmatprep.subr.mxu0 0.0
    %158 = vmatpush1.msra.mxu0 0.0
    %159 = vmatprep.subr.mxu0 0.0
    %160 = vmatpush1.msra.mxu0 0.0
    %161 = vmatprep.subr.mxu0 0.0
    %162 = vmatpush1.msra.mxu0 0.0
    %163 = vmatprep.subr.mxu0 0.0
    %164 = vmatpush1.msra.mxu0 0.0
    %165 = vmatprep.subr.mxu0 0.0
    %166 = vmatpush1.msra.mxu0 0.0
    %167 = vmatprep.subr.mxu0 0.0
    %168 = vmatpush1.msra.mxu0 0.0
    %169 = vmatprep.subr.mxu0 0.0
    %170 = vmatpush1.msra.mxu0 0.0
    %171 = vmatprep.subr.mxu0 0.0
    %172 = vmatpush1.msra.mxu0 0.0
    %173 = vmatprep.subr.mxu0 0.0
    %174 = vmatpush1.msra.mxu0 0.0
    %175 = vmatprep.subr.mxu0 0.0
    %176 = vmatpush1.msra.mxu0 0.0
    %177 = vmatprep.subr.mxu0 0.0
    %178 = vmatpush1.msra.mxu0 0.0
    %179 = vmatprep.subr.mxu0 0.0
    %180 = vmatpush1.msra.mxu0 0.0
    %181 = vmatprep.subr.mxu0 0.0
    %182 = vmatpush1.msra.mxu0 0.0
    %183 = vmatprep.subr.mxu0 0.0
    %184 = vmatpush1.msra.mxu0 0.0
    %185 = vmatprep.subr.mxu0 0.0
    %186 = vmatpush1.msra.mxu0 0.0
    %187 = vmatprep.subr.mxu0 0.0
    %188 = vmatpush1.msra.mxu0 0.0
    %189 = vmatprep.subr.mxu0 0.0
    %190 = vmatpush1.msra.mxu0 0.0
    %191 = vmatprep.subr.mxu0 0.0
    %192 = vmatpush1.msra.mxu0 0.0
    %193 = vmatprep.subr.mxu0 0.0
    %194 = vmatpush1.msra.mxu0 0.0
    %195 = vmatprep.subr.mxu0 0.0
    %196 = vmatpush1.msra.mxu0 0.0
    %197 = vmatprep.subr.mxu0 0.0
    %198 = vmatpush1.msra.mxu0 0.0
    %199 = vmatprep.mubr.f32.mxu0 0.0
    %200 = vmatmul.mubr.f32.gmra.mrb[0].mxu0 %v133
    %v201 = vpop.f32.mrb[0].mxu0
    %v202 = vadd.f32 %v128, %v201
    %v203 = vpop.f32.mrb[0].mxu0
    %204 = vdwg.mxu0
    %v205 = vld [vmem:[#allocation7 + $0x18] sm:$0x1]
    %v206 = vlaneseq
    %v207 = vshrl.u32 %v206, 7
    %v208 = vsub.s32 0, %v207
    %v209 = vrot.slane %v205, %v208
    %v210 = vadd.f32 %v202, %v209
    %v211 = vtanh.pop %v210
    %v212 = vld [vmem:[#allocation7 + $0x20] sm:$0xff]
    %v213 = vld [vmem:[#allocation7 + $0x28] sm:$0xff]
    %v214 = vld [vmem:[#allocation7 + $0x30] sm:$0x1]
    %v215 = vlaneseq
    %v216 = vshrl.u32 %v215, 7
    %v217 = vsub.s32 0, %v216
    %v218 = vrot.slane %v214, %v217
    %v220 = vsel %vm131, %v211, 0
    %222 = vmatprep.subr.mxu0 0.0
    %223 = vmatpush1.msra.mxu0 %v212
    %224 = vmatprep.subr.mxu0 0.0
    %225 = vmatpush1.msra.mxu0 %v213
    %226 = vmatprep.subr.mxu0 0.0
    %227 = vmatpush1.msra.mxu0 0.0
    %228 = vmatprep.subr.mxu0 0.0
    %229 = vmatpush1.msra.mxu0 0.0
    %230 = vmatprep.subr.mxu0 0.0
    %231 = vmatpush1.msra.mxu0 0.0
    %232 = vmatprep.subr.mxu0 0.0
    %233 = vmatpush1.msra.mxu0 0.0
    %234 = vmatprep.subr.mxu0 0.0
    %235 = vmatpush1.msra.mxu0 0.0
    %236 = vmatprep.subr.mxu0 0.0
    %237 = vmatpush1.msra.mxu0 0.0
    %238 = vmatprep.subr.mxu0 0.0
    %239 = vmatpush1.msra.mxu0 0.0
    %240 = vmatprep.subr.mxu0 0.0
    %241 = vmatpush1.msra.mxu0 0.0
    %242 = vmatprep.subr.mxu0 0.0
    %243 = vmatpush1.msra.mxu0 0.0
    %244 = vmatprep.subr.mxu0 0.0
    %245 = vmatpush1.msra.mxu0 0.0
    %246 = vmatprep.subr.mxu0 0.0
    %247 = vmatpush1.msra.mxu0 0.0
    %248 = vmatprep.subr.mxu0 0.0
    %249 = vmatpush1.msra.mxu0 0.0
    %250 = vmatprep.subr.mxu0 0.0
    %251 = vmatpush1.msra.mxu0 0.0
    %252 = vmatprep.subr.mxu0 0.0
    %253 = vmatpush1.msra.mxu0 0.0
    %254 = vmatprep.subr.mxu0 0.0
    %255 = vmatpush1.msra.mxu0 0.0
    %256 = vmatprep.subr.mxu0 0.0
    %257 = vmatpush1.msra.mxu0 0.0
    %258 = vmatprep.subr.mxu0 0.0
    %259 = vmatpush1.msra.mxu0 0.0
    %260 = vmatprep.subr.mxu0 0.0
    %261 = vmatpush1.msra.mxu0 0.0
    %262 = vmatprep.subr.mxu0 0.0
    %263 = vmatpush1.msra.mxu0 0.0
    %264 = vmatprep.subr.mxu0 0.0
    %265 = vmatpush1.msra.mxu0 0.0
    %266 = vmatprep.subr.mxu0 0.0
    %267 = vmatpush1.msra.mxu0 0.0
    %268 = vmatprep.subr.mxu0 0.0
    %269 = vmatpush1.msra.mxu0 0.0
    %270 = vmatprep.subr.mxu0 0.0
    %271 = vmatpush1.msra.mxu0 0.0
    %272 = vmatprep.subr.mxu0 0.0
    %273 = vmatpush1.msra.mxu0 0.0
    %274 = vmatprep.subr.mxu0 0.0
    %275 = vmatpush1.msra.mxu0 0.0
    %276 = vmatprep.subr.mxu0 0.0
    %277 = vmatpush1.msra.mxu0 0.0
    %278 = vmatprep.subr.mxu0 0.0
    %279 = vmatpush1.msra.mxu0 0.0
    %280 = vmatprep.subr.mxu0 0.0
    %281 = vmatpush1.msra.mxu0 0.0
    %282 = vmatprep.subr.mxu0 0.0
    %283 = vmatpush1.msra.mxu0 0.0
    %284 = vmatprep.subr.mxu0 0.0
    %285 = vmatpush1.msra.mxu0 0.0
    %286 = vmatprep.mubr.f32.mxu0 0.0
    %287 = vmatmul.mubr.f32.gmra.mrb[0].mxu0 %v220
    %v288 = vpop.f32.mrb[0].mxu0
    %v289 = vadd.f32 %v218, %v288
    %v290 = vpop.f32.mrb[0].mxu0
    %291 = vdwg.mxu0
    %v292 = vld [vmem:[#allocation7 + $0x38] sm:$0xff]
    %v293 = vld [vmem:[#allocation7 + $0x40] sm:$0xff]
    %v295 = vsel %vm57, %v289, 0
    %297 = vmatprep.subr.mxu0 0.0
    %298 = vmatpush1.msra.mxu0 %v293
    %299 = vmatprep.subr.mxu0 0.0
    %300 = vmatpush1.msra.mxu0 0.0
    %301 = vmatprep.subr.mxu0 0.0
    %302 = vmatpush1.msra.mxu0 0.0
    %303 = vmatprep.subr.mxu0 0.0
    %304 = vmatpush1.msra.mxu0 0.0
    %305 = vmatprep.subr.mxu0 0.0
    %306 = vmatpush1.msra.mxu0 0.0
    %307 = vmatprep.subr.mxu0 0.0
    %308 = vmatpush1.msra.mxu0 0.0
    %309 = vmatprep.subr.mxu0 0.0
    %310 = vmatpush1.msra.mxu0 0.0
    %311 = vmatprep.subr.mxu0 0.0
    %312 = vmatpush1.msra.mxu0 0.0
    %313 = vmatprep.subr.mxu0 0.0
    %314 = vmatpush1.msra.mxu0 0.0
    %315 = vmatprep.subr.mxu0 0.0
    %316 = vmatpush1.msra.mxu0 0.0
    %317 = vmatprep.subr.mxu0 0.0
    %318 = vmatpush1.msra.mxu0 0.0
    %319 = vmatprep.subr.mxu0 0.0
    %320 = vmatpush1.msra.mxu0 0.0
    %321 = vmatprep.subr.mxu0 0.0
    %322 = vmatpush1.msra.mxu0 0.0
    %323 = vmatprep.subr.mxu0 0.0
    %324 = vmatpush1.msra.mxu0 0.0
    %325 = vmatprep.subr.mxu0 0.0
    %326 = vmatpush1.msra.mxu0 0.0
    %327 = vmatprep.subr.mxu0 0.0
    %328 = vmatpush1.msra.mxu0 0.0
    %329 = vmatprep.subr.mxu0 0.0
    %330 = vmatpush1.msra.mxu0 0.0
    %331 = vmatprep.subr.mxu0 0.0
    %332 = vmatpush1.msra.mxu0 0.0
    %333 = vmatprep.subr.mxu0 0.0
    %334 = vmatpush1.msra.mxu0 0.0
    %335 = vmatprep.subr.mxu0 0.0
    %336 = vmatpush1.msra.mxu0 0.0
    %337 = vmatprep.subr.mxu0 0.0
    %338 = vmatpush1.msra.mxu0 0.0
    %339 = vmatprep.subr.mxu0 0.0
    %340 = vmatpush1.msra.mxu0 0.0
    %341 = vmatprep.subr.mxu0 0.0
    %342 = vmatpush1.msra.mxu0 0.0
    %343 = vmatprep.subr.mxu0 0.0
    %344 = vmatpush1.msra.mxu0 0.0
    %345 = vmatprep.subr.mxu0 0.0
    %346 = vmatpush1.msra.mxu0 0.0
    %347 = vmatprep.subr.mxu0 0.0
    %348 = vmatpush1.msra.mxu0 0.0
    %349 = vmatprep.subr.mxu0 0.0
    %350 = vmatpush1.msra.mxu0 0.0
    %351 = vmatprep.subr.mxu0 0.0
    %352 = vmatpush1.msra.mxu0 0.0
    %353 = vmatprep.subr.mxu0 0.0
    %354 = vmatpush1.msra.mxu0 0.0
    %355 = vmatprep.subr.mxu0 0.0
    %356 = vmatpush1.msra.mxu0 0.0
    %357 = vmatprep.subr.mxu0 0.0
    %358 = vmatpush1.msra.mxu0 0.0
    %359 = vmatprep.subr.mxu0 0.0
    %360 = vmatpush1.msra.mxu0 0.0
    %361 = vmatprep.mubr.f32.mxu0 0.0
    %362 = vmatmul.mubr.f32.gmra.mrb[0].mxu0 %v295
    %v363 = vpop.f32.mrb[0].mxu0
    %v364 = vadd.f32 0.0, %v363
    %v365 = vpop.f32.mrb[0].mxu0
    %366 = vdwg.mxu0
    %367 = vmatprep.subr.mxu0 0.0
    %368 = vmatpush1.msra.mxu0 %v292
    %369 = vmatprep.subr.mxu0 0.0
    %370 = vmatpush1.msra.mxu0 0.0
    %371 = vmatprep.subr.mxu0 0.0
    %372 = vmatpush1.msra.mxu0 0.0
    %373 = vmatprep.subr.mxu0 0.0
    %374 = vmatpush1.msra.mxu0 0.0
    %375 = vmatprep.subr.mxu0 0.0
    %376 = vmatpush1.msra.mxu0 0.0
    %377 = vmatprep.subr.mxu0 0.0
    %378 = vmatpush1.msra.mxu0 0.0
    %379 = vmatprep.subr.mxu0 0.0
    %380 = vmatpush1.msra.mxu0 0.0
    %381 = vmatprep.subr.mxu0 0.0
    %382 = vmatpush1.msra.mxu0 0.0
    %383 = vmatprep.subr.mxu0 0.0
    %384 = vmatpush1.msra.mxu0 0.0
    %385 = vmatprep.subr.mxu0 0.0
    %386 = vmatpush1.msra.mxu0 0.0
    %387 = vmatprep.subr.mxu0 0.0
    %388 = vmatpush1.msra.mxu0 0.0
    %389 = vmatprep.subr.mxu0 0.0
    %390 = vmatpush1.msra.mxu0 0.0
    %391 = vmatprep.subr.mxu0 0.0
    %392 = vmatpush1.msra.mxu0 0.0
    %393 = vmatprep.subr.mxu0 0.0
    %394 = vmatpush1.msra.mxu0 0.0
    %395 = vmatprep.subr.mxu0 0.0
    %396 = vmatpush1.msra.mxu0 0.0
    %397 = vmatprep.subr.mxu0 0.0
    %398 = vmatpush1.msra.mxu0 0.0
    %399 = vmatprep.subr.mxu0 0.0
    %400 = vmatpush1.msra.mxu0 0.0
    %401 = vmatprep.subr.mxu0 0.0
    %402 = vmatpush1.msra.mxu0 0.0
    %403 = vmatprep.subr.mxu0 0.0
    %404 = vmatpush1.msra.mxu0 0.0
    %405 = vmatprep.subr.mxu0 0.0
    %406 = vmatpush1.msra.mxu0 0.0
    %407 = vmatprep.subr.mxu0 0.0
    %408 = vmatpush1.msra.mxu0 0.0
    %409 = vmatprep.subr.mxu0 0.0
    %410 = vmatpush1.msra.mxu0 0.0
    %411 = vmatprep.subr.mxu0 0.0
    %412 = vmatpush1.msra.mxu0 0.0
    %413 = vmatprep.subr.mxu0 0.0
    %414 = vmatpush1.msra.mxu0 0.0
    %415 = vmatprep.subr.mxu0 0.0
    %416 = vmatpush1.msra.mxu0 0.0
    %417 = vmatprep.subr.mxu0 0.0
    %418 = vmatpush1.msra.mxu0 0.0
    %419 = vmatprep.subr.mxu0 0.0
    %420 = vmatpush1.msra.mxu0 0.0
    %421 = vmatprep.subr.mxu0 0.0
    %422 = vmatpush1.msra.mxu0 0.0
    %423 = vmatprep.subr.mxu0 0.0
    %424 = vmatpush1.msra.mxu0 0.0
    %425 = vmatprep.subr.mxu0 0.0
    %426 = vmatpush1.msra.mxu0 0.0
    %427 = vmatprep.subr.mxu0 0.0
    %428 = vmatpush1.msra.mxu0 0.0
    %429 = vmatprep.subr.mxu0 0.0
    %430 = vmatpush1.msra.mxu0 0.0
    %431 = vmatprep.mubr.f32.mxu0 0.0
    %432 = vmatmul.mubr.f32.gmra.mrb[0].mxu0 %v59
    %v433 = vpop.f32.mrb[0].mxu0
    %v434 = vadd.f32 %v364, %v433
    %v435 = vpop.f32.mrb[0].mxu0
    %436 = vdwg.mxu0
    %v437 = vld [vmem:[#allocation7 + $0x48] sm:$0x1]
    %v438 = vlaneseq
    %v439 = vshrl.u32 %v438, 7
    %v440 = vsub.s32 0, %v439
    %v441 = vrot.slane %v437, %v440
    %v442 = vadd.f32 %v434, %v441
    %v443 = vtanh.pop %v442
    %v444 = vld [vmem:[#allocation7 + $0x50] sm:$0xff]
    %v445 = vld [vmem:[#allocation7 + $0x58] sm:$0xff]
    %v446 = vld [vmem:[#allocation7 + $0x60] sm:$0xff]
    %v447 = vld [vmem:[#allocation7 + $0x68] sm:$0xff]
    %v448 = vld [vmem:[#allocation7 + $0x70] sm:$0xff]
    %v449 = vld [vmem:[#allocation7 + $0x78] sm:$0xff]
    %v450 = vld [vmem:[#allocation7 + $0x80] sm:$0xff]
    %v451 = vld [vmem:[#allocation7 + $0x88] sm:$0xff]
    %v452 = vld [vmem:[#allocation7 + $0x90] sm:$0xff]
    %v453 = vld [vmem:[#allocation7 + $0x98] sm:$0xff]
    %v454 = vld [vmem:[#allocation7 + $0xa0] sm:$0xff]
    %v455 = vld [vmem:[#allocation7 + $0xa8] sm:$0xff]
    %v456 = vld [vmem:[#allocation7 + $0xb0] sm:$0xff]
    %v457 = vld [vmem:[#allocation7 + $0xb8] sm:$0xff]
    %v458 = vld [vmem:[#allocation7 + $0xc0] sm:$0xff]
    %v459 = vld [vmem:[#allocation7 + $0xc8] sm:$0xff]
    %v460 = vld [vmem:[#allocation7 + $0xd0] sm:$0x1]
    %v461 = vlaneseq
    %v462 = vshrl.u32 %v461, 7
    %v463 = vsub.s32 0, %v462
    %v464 = vrot.slane %v460, %v463
    %465 = vmatprep.subr.mxu0 0.0
    %466 = vmatpush1.msra.mxu0 %v444
    %467 = vmatprep.subr.mxu0 0.0
    %468 = vmatpush1.msra.mxu0 %v445
    %469 = vmatprep.subr.mxu0 0.0
    %470 = vmatpush1.msra.mxu0 %v446
    %471 = vmatprep.subr.mxu0 0.0
    %472 = vmatpush1.msra.mxu0 %v447
    %473 = vmatprep.subr.mxu0 0.0
    %474 = vmatpush1.msra.mxu0 %v448
    %475 = vmatprep.subr.mxu0 0.0
    %476 = vmatpush1.msra.mxu0 %v449
    %477 = vmatprep.subr.mxu0 0.0
    %478 = vmatpush1.msra.mxu0 %v450
    %479 = vmatprep.subr.mxu0 0.0
    %480 = vmatpush1.msra.mxu0 %v451
    %481 = vmatprep.subr.mxu0 0.0
    %482 = vmatpush1.msra.mxu0 %v452
    %483 = vmatprep.subr.mxu0 0.0
    %484 = vmatpush1.msra.mxu0 %v453
    %485 = vmatprep.subr.mxu0 0.0
    %486 = vmatpush1.msra.mxu0 %v454
    %487 = vmatprep.subr.mxu0 0.0
    %488 = vmatpush1.msra.mxu0 %v455
    %489 = vmatprep.subr.mxu0 0.0
    %490 = vmatpush1.msra.mxu0 %v456
    %491 = vmatprep.subr.mxu0 0.0
    %492 = vmatpush1.msra.mxu0 %v457
    %493 = vmatprep.subr.mxu0 0.0
    %494 = vmatpush1.msra.mxu0 %v458
    %495 = vmatprep.subr.mxu0 0.0
    %496 = vmatpush1.msra.mxu0 %v459
    %497 = vmatprep.subr.mxu0 0.0
    %498 = vmatpush1.msra.mxu0 0.0
    %499 = vmatprep.subr.mxu0 0.0
    %500 = vmatpush1.msra.mxu0 0.0
    %501 = vmatprep.subr.mxu0 0.0
    %502 = vmatpush1.msra.mxu0 0.0
    %503 = vmatprep.subr.mxu0 0.0
    %504 = vmatpush1.msra.mxu0 0.0
    %505 = vmatprep.subr.mxu0 0.0
    %506 = vmatpush1.msra.mxu0 0.0
    %507 = vmatprep.subr.mxu0 0.0
    %508 = vmatpush1.msra.mxu0 0.0
    %509 = vmatprep.subr.mxu0 0.0
    %510 = vmatpush1.msra.mxu0 0.0
    %511 = vmatprep.subr.mxu0 0.0
    %512 = vmatpush1.msra.mxu0 0.0
    %513 = vmatprep.subr.mxu0 0.0
    %514 = vmatpush1.msra.mxu0 0.0
    %515 = vmatprep.subr.mxu0 0.0
    %516 = vmatpush1.msra.mxu0 0.0
    %517 = vmatprep.subr.mxu0 0.0
    %518 = vmatpush1.msra.mxu0 0.0
    %519 = vmatprep.subr.mxu0 0.0
    %520 = vmatpush1.msra.mxu0 0.0
    %521 = vmatprep.subr.mxu0 0.0
    %522 = vmatpush1.msra.mxu0 0.0
    %523 = vmatprep.subr.mxu0 0.0
    %524 = vmatpush1.msra.mxu0 0.0
    %525 = vmatprep.subr.mxu0 0.0
    %526 = vmatpush1.msra.mxu0 0.0
    %527 = vmatprep.subr.mxu0 0.0
    %528 = vmatpush1.msra.mxu0 0.0
    %529 = vmatprep.mubr.f32.mxu0 0.0
    %530 = vmatmul.mubr.f32.gmra.mrb[0].mxu0 %v443
    %v531 = vpop.f32.mrb[0].mxu0
    %v532 = vadd.f32 %v464, %v531
    %v533 = vpop.f32.mrb[0].mxu0
    %534 = vdwg.mxu0
    %v535 = vtanh.pop %v532
    %v536 = vld [vmem:[#allocation7 + $0xd8] sm:$0xff]
    %v537 = vld [vmem:[#allocation7 + $0xe0] sm:$0xff]
    %v538 = vld [vmem:[#allocation7 + $0xe8] sm:$0xff]
    %v539 = vld [vmem:[#allocation7 + $0xf0] sm:$0xff]
    %v540 = vld [vmem:[#allocation7 + $0xf8] sm:$0xff]
    %v541 = vld [vmem:[#allocation7 + $0x100] sm:$0xff]
    %vm542 = vcmask 392192
    %v544 = vsel %vm542, %v535, 0
    %546 = vmatprep.subr.mxu0 0.0
    %547 = vmatpush1.msra.mxu0 %v536
    %548 = vmatprep.subr.mxu0 0.0
    %549 = vmatpush1.msra.mxu0 %v537
    %550 = vmatprep.subr.mxu0 0.0
    %551 = vmatpush1.msra.mxu0 %v538
    %552 = vmatprep.subr.mxu0 0.0
    %553 = vmatpush1.msra.mxu0 %v539
    %554 = vmatprep.subr.mxu0 0.0
    %555 = vmatpush1.msra.mxu0 %v540
    %556 = vmatprep.subr.mxu0 0.0
    %557 = vmatpush1.msra.mxu0 %v541
    %558 = vmatprep.subr.mxu0 0.0
    %559 = vmatpush1.msra.mxu0 0.0
    %560 = vmatprep.subr.mxu0 0.0
    %561 = vmatpush1.msra.mxu0 0.0
    %562 = vmatprep.subr.mxu0 0.0
    %563 = vmatpush1.msra.mxu0 0.0
    %564 = vmatprep.subr.mxu0 0.0
    %565 = vmatpush1.msra.mxu0 0.0
    %566 = vmatprep.subr.mxu0 0.0
    %567 = vmatpush1.msra.mxu0 0.0
    %568 = vmatprep.subr.mxu0 0.0
    %569 = vmatpush1.msra.mxu0 0.0
    %570 = vmatprep.subr.mxu0 0.0
    %571 = vmatpush1.msra.mxu0 0.0
    %572 = vmatprep.subr.mxu0 0.0
    %573 = vmatpush1.msra.mxu0 0.0
    %574 = vmatprep.subr.mxu0 0.0
    %575 = vmatpush1.msra.mxu0 0.0
    %576 = vmatprep.subr.mxu0 0.0
    %577 = vmatpush1.msra.mxu0 0.0
    %578 = vmatprep.subr.mxu0 0.0
    %579 = vmatpush1.msra.mxu0 0.0
    %580 = vmatprep.subr.mxu0 0.0
    %581 = vmatpush1.msra.mxu0 0.0
    %582 = vmatprep.subr.mxu0 0.0
    %583 = vmatpush1.msra.mxu0 0.0
    %584 = vmatprep.subr.mxu0 0.0
    %585 = vmatpush1.msra.mxu0 0.0
    %586 = vmatprep.subr.mxu0 0.0
    %587 = vmatpush1.msra.mxu0 0.0
    %588 = vmatprep.subr.mxu0 0.0
    %589 = vmatpush1.msra.mxu0 0.0
    %590 = vmatprep.subr.mxu0 0.0
    %591 = vmatpush1.msra.mxu0 0.0
    %592 = vmatprep.subr.mxu0 0.0
    %593 = vmatpush1.msra.mxu0 0.0
    %594 = vmatprep.subr.mxu0 0.0
    %595 = vmatpush1.msra.mxu0 0.0
    %596 = vmatprep.subr.mxu0 0.0
    %597 = vmatpush1.msra.mxu0 0.0
    %598 = vmatprep.subr.mxu0 0.0
    %599 = vmatpush1.msra.mxu0 0.0
    %600 = vmatprep.subr.mxu0 0.0
    %601 = vmatpush1.msra.mxu0 0.0
    %602 = vmatprep.subr.mxu0 0.0
    %603 = vmatpush1.msra.mxu0 0.0
    %604 = vmatprep.subr.mxu0 0.0
    %605 = vmatpush1.msra.mxu0 0.0
    %606 = vmatprep.subr.mxu0 0.0
    %607 = vmatpush1.msra.mxu0 0.0
    %608 = vmatprep.subr.mxu0 0.0
    %609 = vmatpush1.msra.mxu0 0.0
    %610 = vmatprep.mubr.f32.mxu0 0.0
    %611 = vmatmul.mubr.f32.gmra.mrb[0].mxu0 %v544
    %v612 = vpop.f32.mrb[0].mxu0
    %v613 = vadd.f32 0.0, %v612
    %v614 = vpop.f32.mrb[0].mxu0
    %615 = vdwg.mxu0
    %v616 = vld [vmem:[#allocation7 + $0x108] sm:$0xff]
    %v617 = vld [vmem:[#allocation7 + $0x110] sm:$0x1]
    %v618 = vlaneseq
    %v619 = vshrl.u32 %v618, 7
    %v620 = vsub.s32 0, %v619
    %v621 = vrot.slane %v617, %v620
    %622 = vmatprep.subr.mxu0 0.0
    %623 = vmatpush1.msra.mxu0 %v616
    %624 = vmatprep.subr.mxu0 0.0
    %625 = vmatpush1.msra.mxu0 0.0
    %626 = vmatprep.subr.mxu0 0.0
    %627 = vmatpush1.msra.mxu0 0.0
    %628 = vmatprep.subr.mxu0 0.0
    %629 = vmatpush1.msra.mxu0 0.0
    %630 = vmatprep.subr.mxu0 0.0
    %631 = vmatpush1.msra.mxu0 0.0
    %632 = vmatprep.subr.mxu0 0.0
    %633 = vmatpush1.msra.mxu0 0.0
    %634 = vmatprep.subr.mxu0 0.0
    %635 = vmatpush1.msra.mxu0 0.0
    %636 = vmatprep.subr.mxu0 0.0
    %637 = vmatpush1.msra.mxu0 0.0
    %638 = vmatprep.subr.mxu0 0.0
    %639 = vmatpush1.msra.mxu0 0.0
    %640 = vmatprep.subr.mxu0 0.0
    %641 = vmatpush1.msra.mxu0 0.0
    %642 = vmatprep.subr.mxu0 0.0
    %643 = vmatpush1.msra.mxu0 0.0
    %644 = vmatprep.subr.mxu0 0.0
    %645 = vmatpush1.msra.mxu0 0.0
    %646 = vmatprep.subr.mxu0 0.0
    %647 = vmatpush1.msra.mxu0 0.0
    %648 = vmatprep.subr.mxu0 0.0
    %649 = vmatpush1.msra.mxu0 0.0
    %650 = vmatprep.subr.mxu0 0.0
    %651 = vmatpush1.msra.mxu0 0.0
    %652 = vmatprep.subr.mxu0 0.0
    %653 = vmatpush1.msra.mxu0 0.0
    %654 = vmatprep.subr.mxu0 0.0
    %655 = vmatpush1.msra.mxu0 0.0
    %656 = vmatprep.subr.mxu0 0.0
    %657 = vmatpush1.msra.mxu0 0.0
    %658 = vmatprep.subr.mxu0 0.0
    %659 = vmatpush1.msra.mxu0 0.0
    %660 = vmatprep.subr.mxu0 0.0
    %661 = vmatpush1.msra.mxu0 0.0
    %662 = vmatprep.subr.mxu0 0.0
    %663 = vmatpush1.msra.mxu0 0.0
    %664 = vmatprep.subr.mxu0 0.0
    %665 = vmatpush1.msra.mxu0 0.0
    %666 = vmatprep.subr.mxu0 0.0
    %667 = vmatpush1.msra.mxu0 0.0
    %668 = vmatprep.subr.mxu0 0.0
    %669 = vmatpush1.msra.mxu0 0.0
    %670 = vmatprep.subr.mxu0 0.0
    %671 = vmatpush1.msra.mxu0 0.0
    %672 = vmatprep.subr.mxu0 0.0
    %673 = vmatpush1.msra.mxu0 0.0
    %674 = vmatprep.subr.mxu0 0.0
    %675 = vmatpush1.msra.mxu0 0.0
    %676 = vmatprep.subr.mxu0 0.0
    %677 = vmatpush1.msra.mxu0 0.0
    %678 = vmatprep.subr.mxu0 0.0
    %679 = vmatpush1.msra.mxu0 0.0
    %680 = vmatprep.subr.mxu0 0.0
    %681 = vmatpush1.msra.mxu0 0.0
    %682 = vmatprep.subr.mxu0 0.0
    %683 = vmatpush1.msra.mxu0 0.0
    %684 = vmatprep.subr.mxu0 0.0
    %685 = vmatpush1.msra.mxu0 0.0
    %686 = vmatprep.mubr.f32.mxu0 0.0
    %687 = vmatmul.mubr.f32.gmra.mrb[0].mxu0 %v295
    %v688 = vpop.f32.mrb[0].mxu0
    %v689 = vadd.f32 %v621, %v688
    %v690 = vpop.f32.mrb[0].mxu0
    %691 = vdwg.mxu0
    %v692 = vtanh.pop %v689
    %v693 = vld [vmem:[#allocation7 + $0x118] sm:$0xff]
    %v694 = vld [vmem:[#allocation7 + $0x120] sm:$0x1]
    %v695 = vlaneseq
    %v696 = vshrl.u32 %v695, 7
    %v697 = vsub.s32 0, %v696
    %v698 = vrot.slane %v694, %v697
    %v700 = vsel %vm57, %v692, 0
    %702 = vmatprep.subr.mxu0 0.0
    %703 = vmatpush1.msra.mxu0 %v693
    %704 = vmatprep.subr.mxu0 0.0
    %705 = vmatpush1.msra.mxu0 0.0
    %706 = vmatprep.subr.mxu0 0.0
    %707 = vmatpush1.msra.mxu0 0.0
    %708 = vmatprep.subr.mxu0 0.0
    %709 = vmatpush1.msra.mxu0 0.0
    %710 = vmatprep.subr.mxu0 0.0
    %711 = vmatpush1.msra.mxu0 0.0
    %712 = vmatprep.subr.mxu0 0.0
    %713 = vmatpush1.msra.mxu0 0.0
    %714 = vmatprep.subr.mxu0 0.0
    %715 = vmatpush1.msra.mxu0 0.0
    %716 = vmatprep.subr.mxu0 0.0
    %717 = vmatpush1.msra.mxu0 0.0
    %718 = vmatprep.subr.mxu0 0.0
    %719 = vmatpush1.msra.mxu0 0.0
    %720 = vmatprep.subr.mxu0 0.0
    %721 = vmatpush1.msra.mxu0 0.0
    %722 = vmatprep.subr.mxu0 0.0
    %723 = vmatpush1.msra.mxu0 0.0
    %724 = vmatprep.subr.mxu0 0.0
    %725 = vmatpush1.msra.mxu0 0.0
    %726 = vmatprep.subr.mxu0 0.0
    %727 = vmatpush1.msra.mxu0 0.0
    %728 = vmatprep.subr.mxu0 0.0
    %729 = vmatpush1.msra.mxu0 0.0
    %730 = vmatprep.subr.mxu0 0.0
    %731 = vmatpush1.msra.mxu0 0.0
    %732 = vmatprep.subr.mxu0 0.0
    %733 = vmatpush1.msra.mxu0 0.0
    %734 = vmatprep.subr.mxu0 0.0
    %735 = vmatpush1.msra.mxu0 0.0
    %736 = vmatprep.subr.mxu0 0.0
    %737 = vmatpush1.msra.mxu0 0.0
    %738 = vmatprep.subr.mxu0 0.0
    %739 = vmatpush1.msra.mxu0 0.0
    %740 = vmatprep.subr.mxu0 0.0
    %741 = vmatpush1.msra.mxu0 0.0
    %742 = vmatprep.subr.mxu0 0.0
    %743 = vmatpush1.msra.mxu0 0.0
    %744 = vmatprep.subr.mxu0 0.0
    %745 = vmatpush1.msra.mxu0 0.0
    %746 = vmatprep.subr.mxu0 0.0
    %747 = vmatpush1.msra.mxu0 0.0
    %748 = vmatprep.subr.mxu0 0.0
    %749 = vmatpush1.msra.mxu0 0.0
    %750 = vmatprep.subr.mxu0 0.0
    %751 = vmatpush1.msra.mxu0 0.0
    %752 = vmatprep.subr.mxu0 0.0
    %753 = vmatpush1.msra.mxu0 0.0
    %754 = vmatprep.subr.mxu0 0.0
    %755 = vmatpush1.msra.mxu0 0.0
    %756 = vmatprep.subr.mxu0 0.0
    %757 = vmatpush1.msra.mxu0 0.0
    %758 = vmatprep.subr.mxu0 0.0
    %759 = vmatpush1.msra.mxu0 0.0
    %760 = vmatprep.subr.mxu0 0.0
    %761 = vmatpush1.msra.mxu0 0.0
    %762 = vmatprep.subr.mxu0 0.0
    %763 = vmatpush1.msra.mxu0 0.0
    %764 = vmatprep.subr.mxu0 0.0
    %765 = vmatpush1.msra.mxu0 0.0
    %766 = vmatprep.mubr.f32.mxu0 0.0
    %767 = vmatmul.mubr.f32.gmra.mrb[0].mxu0 %v700
    %v768 = vpop.f32.mrb[0].mxu0
    %v769 = vadd.f32 %v698, %v768
    %v770 = vpop.f32.mrb[0].mxu0
    %771 = vdwg.mxu0
    %v772 = vld [vmem:[#allocation7 + $0x128] sm:$0x3f]
    %v773 = vld [vmem:[#allocation7 + $0x130] sm:$0xff]
    %v775 = vsel %vm57, %v769, 0
    %777 = vmatprep.subr.mxu0 0.0
    %778 = vmatpush1.msra.mxu0 %v773
    %779 = vmatprep.subr.mxu0 0.0
    %780 = vmatpush1.msra.mxu0 0.0
    %781 = vmatprep.subr.mxu0 0.0
    %782 = vmatpush1.msra.mxu0 0.0
    %783 = vmatprep.subr.mxu0 0.0
    %784 = vmatpush1.msra.mxu0 0.0
    %785 = vmatprep.subr.mxu0 0.0
    %786 = vmatpush1.msra.mxu0 0.0
    %787 = vmatprep.subr.mxu0 0.0
    %788 = vmatpush1.msra.mxu0 0.0
    %789 = vmatprep.subr.mxu0 0.0
    %790 = vmatpush1.msra.mxu0 0.0
    %791 = vmatprep.subr.mxu0 0.0
    %792 = vmatpush1.msra.mxu0 0.0
    %793 = vmatprep.subr.mxu0 0.0
    %794 = vmatpush1.msra.mxu0 0.0
    %795 = vmatprep.subr.mxu0 0.0
    %796 = vmatpush1.msra.mxu0 0.0
    %797 = vmatprep.subr.mxu0 0.0
    %798 = vmatpush1.msra.mxu0 0.0
    %799 = vmatprep.subr.mxu0 0.0
    %800 = vmatpush1.msra.mxu0 0.0
    %801 = vmatprep.subr.mxu0 0.0
    %802 = vmatpush1.msra.mxu0 0.0
    %803 = vmatprep.subr.mxu0 0.0
    %804 = vmatpush1.msra.mxu0 0.0
    %805 = vmatprep.subr.mxu0 0.0
    %806 = vmatpush1.msra.mxu0 0.0
    %807 = vmatprep.subr.mxu0 0.0
    %808 = vmatpush1.msra.mxu0 0.0
    %809 = vmatprep.subr.mxu0 0.0
    %810 = vmatpush1.msra.mxu0 0.0
    %811 = vmatprep.subr.mxu0 0.0
    %812 = vmatpush1.msra.mxu0 0.0
    %813 = vmatprep.subr.mxu0 0.0
    %814 = vmatpush1.msra.mxu0 0.0
    %815 = vmatprep.subr.mxu0 0.0
    %816 = vmatpush1.msra.mxu0 0.0
    %817 = vmatprep.subr.mxu0 0.0
    %818 = vmatpush1.msra.mxu0 0.0
    %819 = vmatprep.subr.mxu0 0.0
    %820 = vmatpush1.msra.mxu0 0.0
    %821 = vmatprep.subr.mxu0 0.0
    %822 = vmatpush1.msra.mxu0 0.0
    %823 = vmatprep.subr.mxu0 0.0
    %824 = vmatpush1.msra.mxu0 0.0
    %825 = vmatprep.subr.mxu0 0.0
    %826 = vmatpush1.msra.mxu0 0.0
    %827 = vmatprep.subr.mxu0 0.0
    %828 = vmatpush1.msra.mxu0 0.0
    %829 = vmatprep.subr.mxu0 0.0
    %830 = vmatpush1.msra.mxu0 0.0
    %831 = vmatprep.subr.mxu0 0.0
    %832 = vmatpush1.msra.mxu0 0.0
    %833 = vmatprep.subr.mxu0 0.0
    %834 = vmatpush1.msra.mxu0 0.0
    %835 = vmatprep.subr.mxu0 0.0
    %836 = vmatpush1.msra.mxu0 0.0
    %837 = vmatprep.subr.mxu0 0.0
    %838 = vmatpush1.msra.mxu0 0.0
    %839 = vmatprep.subr.mxu0 0.0
    %840 = vmatpush1.msra.mxu0 0.0
    %841 = vmatprep.mubr.f32.mxu0 0.0
    %842 = vmatmul.mubr.f32.gmra.mrb[0].mxu0 %v775
    %v843 = vpop.f32.mrb[0].mxu0
    %v844 = vadd.f32 0.0, %v843
    %v845 = vpop.f32.mrb[0].mxu0
    %846 = vdwg.mxu0
    %vm847 = vcmask 48128
    %v849 = vsel %vm847, %v613, 0
    %vm851 = vcmask 1045504
    %v853 = vsel %vm851, %v772, 0
    %855 = vmatprep.subr.mxu0 0.0
    %856 = vmatpush1.msra.mxu0 %v853
    %857 = vmatprep.subr.mxu0 0.0
    %858 = vmatpush1.msra.mxu0 0.0
    %859 = vmatprep.subr.mxu0 0.0
    %860 = vmatpush1.msra.mxu0 0.0
    %861 = vmatprep.subr.mxu0 0.0
    %862 = vmatpush1.msra.mxu0 0.0
    %863 = vmatprep.subr.mxu0 0.0
    %864 = vmatpush1.msra.mxu0 0.0
    %865 = vmatprep.subr.mxu0 0.0
    %866 = vmatpush1.msra.mxu0 0.0
    %867 = vmatprep.subr.mxu0 0.0
    %868 = vmatpush1.msra.mxu0 0.0
    %869 = vmatprep.subr.mxu0 0.0
    %870 = vmatpush1.msra.mxu0 0.0
    %871 = vmatprep.subr.mxu0 0.0
    %872 = vmatpush1.msra.mxu0 0.0
    %873 = vmatprep.subr.mxu0 0.0
    %874 = vmatpush1.msra.mxu0 0.0
    %875 = vmatprep.subr.mxu0 0.0
    %876 = vmatpush1.msra.mxu0 0.0
    %877 = vmatprep.subr.mxu0 0.0
    %878 = vmatpush1.msra.mxu0 0.0
    %879 = vmatprep.subr.mxu0 0.0
    %880 = vmatpush1.msra.mxu0 0.0
    %881 = vmatprep.subr.mxu0 0.0
    %882 = vmatpush1.msra.mxu0 0.0
    %883 = vmatprep.subr.mxu0 0.0
    %884 = vmatpush1.msra.mxu0 0.0
    %885 = vmatprep.subr.mxu0 0.0
    %886 = vmatpush1.msra.mxu0 0.0
    %887 = vmatprep.subr.mxu0 0.0
    %888 = vmatpush1.msra.mxu0 0.0
    %889 = vmatprep.subr.mxu0 0.0
    %890 = vmatpush1.msra.mxu0 0.0
    %891 = vmatprep.subr.mxu0 0.0
    %892 = vmatpush1.msra.mxu0 0.0
    %893 = vmatprep.subr.mxu0 0.0
    %894 = vmatpush1.msra.mxu0 0.0
    %895 = vmatprep.subr.mxu0 0.0
    %896 = vmatpush1.msra.mxu0 0.0
    %897 = vmatprep.subr.mxu0 0.0
    %898 = vmatpush1.msra.mxu0 0.0
    %899 = vmatprep.subr.mxu0 0.0
    %900 = vmatpush1.msra.mxu0 0.0
    %901 = vmatprep.subr.mxu0 0.0
    %902 = vmatpush1.msra.mxu0 0.0
    %903 = vmatprep.subr.mxu0 0.0
    %904 = vmatpush1.msra.mxu0 0.0
    %905 = vmatprep.subr.mxu0 0.0
    %906 = vmatpush1.msra.mxu0 0.0
    %907 = vmatprep.subr.mxu0 0.0
    %908 = vmatpush1.msra.mxu0 0.0
    %909 = vmatprep.subr.mxu0 0.0
    %910 = vmatpush1.msra.mxu0 0.0
    %911 = vmatprep.subr.mxu0 0.0
    %912 = vmatpush1.msra.mxu0 0.0
    %913 = vmatprep.subr.mxu0 0.0
    %914 = vmatpush1.msra.mxu0 0.0
    %915 = vmatprep.subr.mxu0 0.0
    %916 = vmatpush1.msra.mxu0 0.0
    %917 = vmatprep.subr.mxu0 0.0
    %918 = vmatpush1.msra.mxu0 0.0
    %919 = vmatprep.mubr.f32.mxu0 0.0
    %920 = vmatmul.mubr.f32.gmra.mrb[0].mxu0 %v849
    %v921 = vpop.f32.mrb[0].mxu0
    %v922 = vadd.f32 %v844, %v921
    %v923 = vpop.f32.mrb[0].mxu0
    %924 = vdwg.mxu0
    %v925 = vld [vmem:[#allocation7 + $0x138] sm:$0x1]
    %v926 = vlaneseq
    %v927 = vshrl.u32 %v926, 7
    %v928 = vsub.s32 0, %v927
    %v929 = vrot.slane %v925, %v928
    %v930 = vadd.f32 %v922, %v929
    %v931 = vtanh.pop %v930
    %v932 = vld [vmem:[#allocation7 + $0x140] sm:$0xff]
    %v933 = vld [vmem:[#allocation7 + $0x148] sm:$0xff]
    %v934 = vld [vmem:[#allocation7 + $0x150] sm:$0x1]
    %v935 = vlaneseq
    %v936 = vshrl.u32 %v935, 7
    %v937 = vsub.s32 0, %v936
    %v938 = vrot.slane %v934, %v937
    %v940 = vsel %vm131, %v931, 0
    %942 = vmatprep.subr.mxu0 0.0
    %943 = vmatpush1.msra.mxu0 %v932
    %944 = vmatprep.subr.mxu0 0.0
    %945 = vmatpush1.msra.mxu0 %v933
    %946 = vmatprep.subr.mxu0 0.0
    %947 = vmatpush1.msra.mxu0 0.0
    %948 = vmatprep.subr.mxu0 0.0
    %949 = vmatpush1.msra.mxu0 0.0
    %950 = vmatprep.subr.mxu0 0.0
    %951 = vmatpush1.msra.mxu0 0.0
    %952 = vmatprep.subr.mxu0 0.0
    %953 = vmatpush1.msra.mxu0 0.0
    %954 = vmatprep.subr.mxu0 0.0
    %955 = vmatpush1.msra.mxu0 0.0
    %956 = vmatprep.subr.mxu0 0.0
    %957 = vmatpush1.msra.mxu0 0.0
    %958 = vmatprep.subr.mxu0 0.0
    %959 = vmatpush1.msra.mxu0 0.0
    %960 = vmatprep.subr.mxu0 0.0
    %961 = vmatpush1.msra.mxu0 0.0
    %962 = vmatprep.subr.mxu0 0.0
    %963 = vmatpush1.msra.mxu0 0.0
    %964 = vmatprep.subr.mxu0 0.0
    %965 = vmatpush1.msra.mxu0 0.0
    %966 = vmatprep.subr.mxu0 0.0
    %967 = vmatpush1.msra.mxu0 0.0
    %968 = vmatprep.subr.mxu0 0.0
    %969 = vmatpush1.msra.mxu0 0.0
    %970 = vmatprep.subr.mxu0 0.0
    %971 = vmatpush1.msra.mxu0 0.0
    %972 = vmatprep.subr.mxu0 0.0
    %973 = vmatpush1.msra.mxu0 0.0
    %974 = vmatprep.subr.mxu0 0.0
    %975 = vmatpush1.msra.mxu0 0.0
    %976 = vmatprep.subr.mxu0 0.0
    %977 = vmatpush1.msra.mxu0 0.0
    %978 = vmatprep.subr.mxu0 0.0
    %979 = vmatpush1.msra.mxu0 0.0
    %980 = vmatprep.subr.mxu0 0.0
    %981 = vmatpush1.msra.mxu0 0.0
    %982 = vmatprep.subr.mxu0 0.0
    %983 = vmatpush1.msra.mxu0 0.0
    %984 = vmatprep.subr.mxu0 0.0
    %985 = vmatpush1.msra.mxu0 0.0
    %986 = vmatprep.subr.mxu0 0.0
    %987 = vmatpush1.msra.mxu0 0.0
    %988 = vmatprep.subr.mxu0 0.0
    %989 = vmatpush1.msra.mxu0 0.0
    %990 = vmatprep.subr.mxu0 0.0
    %991 = vmatpush1.msra.mxu0 0.0
    %992 = vmatprep.subr.mxu0 0.0
    %993 = vmatpush1.msra.mxu0 0.0
    %994 = vmatprep.subr.mxu0 0.0
    %995 = vmatpush1.msra.mxu0 0.0
    %996 = vmatprep.subr.mxu0 0.0
    %997 = vmatpush1.msra.mxu0 0.0
    %998 = vmatprep.subr.mxu0 0.0
    %999 = vmatpush1.msra.mxu0 0.0
    %1000 = vmatprep.subr.mxu0 0.0
    %1001 = vmatpush1.msra.mxu0 0.0
    %1002 = vmatprep.subr.mxu0 0.0
    %1003 = vmatpush1.msra.mxu0 0.0
    %1004 = vmatprep.subr.mxu0 0.0
    %1005 = vmatpush1.msra.mxu0 0.0
    %1006 = vmatprep.mubr.f32.mxu0 0.0
    %1007 = vmatmul.mubr.f32.gmra.mrb[0].mxu0 %v940
    %v1008 = vpop.f32.mrb[0].mxu0
    %v1009 = vadd.f32 %v938, %v1008
    %v1010 = vpop.f32.mrb[0].mxu0
    %1011 = vdwg.mxu0
    %1012 = vst.msk [vmem:[#allocation8] sm:$0xff] %vm131, %v1009
    %1013 = vrot.lane.b32.xlu0 %v289, 16
    %v1014 = vpop.permute.xlu0 %1013
    %vm1016 = vcmask 261248
    %1017 = vst.msk [vmem:[#allocation8] sm:$0xff] %vm1016, %v1014
    // Predicated region
    $region26: #{tpu_custom_call.1} parent=1 // pred_check
      _
    $region27: #{tpu_custom_call.1} parent=1 // pred_check_branch
      %1019 = sbr.rel (0) target = $region29
    $region28: #{tpu_custom_call.1} parent=1 // pred_region
      %s1021 = ssub.s32 128, 128
      %1022 = vsyncadd [#allocation4], %s1021
      %s1024 = sshll.u32 [#allocation8], 4
      %s1025 = int_to_ptr.vmem [resolvable:$true] %s1024
      %1027 = dma.vmem_to_hbm [thread:$0]  %s1025, 128, %s3, [#allocation4]
    $region29: #{tpu_custom_call.1} parent=1 // pred_fallthru
      _
    // Predicated region
    $region30: #{tpu_custom_call.1} parent=1 // pred_check
      _
    $region31: #{tpu_custom_call.1} parent=1 // pred_check_branch
      %1029 = sbr.rel (0) target = $region33
    $region32: #{tpu_custom_call.1} parent=1 // pred_region
      %1030 = dma.done [#allocation4], 128
    $region33: #{tpu_custom_call.1} parent=1 // pred_fallthru
      _
    %1031 = vsyncpa [#allocation3], 1
    %1032 = vsyncpa [#allocation6], 1
    %1033 = vsyncpa [#allocation4], 1

</llo_original>
